<compile_context>
chip_gen: v7x
topology: tpu7x:2x2x1
jax: 0.10.0
libtpu: 0.0.40
codegen_flags: <defaults>
</compile_context>

<pallas_src>
import functools

import jax
import jax.numpy as jnp
from jax.experimental import pallas as pl
from jax.experimental.pallas import tpu as pltpu

_LANE = 128
_MIB = 1 << 20


def _round_up(x, m):
    return ((x + m - 1) // m) * m


def _device_kind():
    try:
        return jax.devices()[0].device_kind.lower()
    except Exception:
        return ""


def _is_v7x():
    kind = _device_kind()
    return ("v7" in kind) or ("7x" in kind)


def _use_bf16_epilogue():
    # v6e / v7x have bf16 VPU + EUP paths; v5e and older do not.
    kind = _device_kind()
    return any(tag in kind for tag in ("v6", "v7", "7x"))


def _make_mlp_kernel(bf16_epilogue):
    act_dtype = jnp.bfloat16

    def kernel(x_ref, w0_ref, b0_ref, w1_ref, b1_ref, w2_ref, b2_ref, o_ref):
        # Layer 0: bf16 MXU matmul, f32 accumulation.
        h = jnp.dot(x_ref[...], w0_ref[...], preferred_element_type=jnp.float32)
        if bf16_epilogue:
            h = jnp.tanh(h.astype(act_dtype) + b0_ref[...].astype(act_dtype))
        else:
            h = jnp.tanh(h + b0_ref[...]).astype(act_dtype)
        # Layer 1
        h = jnp.dot(h, w1_ref[...], preferred_element_type=jnp.float32)
        if bf16_epilogue:
            h = jnp.tanh(h.astype(act_dtype) + b1_ref[...].astype(act_dtype))
        else:
            h = jnp.tanh(h + b1_ref[...]).astype(act_dtype)
        # Layer 2: output Linear, no activation (matches NN.forward).
        h = jnp.dot(h, w2_ref[...], preferred_element_type=jnp.float32)
        o_ref[...] = (h + b2_ref[...]).astype(o_ref.dtype)

    return kernel


def prepare_params(params):
    """Pad feature dims to multiples of 128 and cast weights to bf16 — ONCE.

    Call this outside the per-step path so the kernel wrapper never re-pads /
    re-casts the weights (saves ~1.5x the weight bytes of HBM traffic per
    call). Zero padding is exact: tanh(0)=0 and padded rows/cols are zero.

    params: ((w0, b0), (w1, b1), (w2, b2)) with w_i: [in_i, out_i].
    Returns (prepared_arrays, out_size).
    """
    (w0, b0), (w1, b1), (w2, b2) = params
    in_size, h0 = w0.shape
    h1 = w1.shape[1]
    out_size = w2.shape[1]
    in_p = _round_up(in_size, _LANE)
    h0_p = _round_up(h0, _LANE)
    h1_p = _round_up(h1, _LANE)
    out_p = _round_up(out_size, _LANE)

    def pad_w(w, rp, cp):
        r, c = w.shape
        return jnp.pad(w, ((0, rp - r), (0, cp - c))).astype(jnp.bfloat16)

    def pad_b(b, cp):
        b = jnp.reshape(b, (1, -1)).astype(jnp.float32)
        return jnp.pad(b, ((0, 0), (0, cp - b.shape[1])))

    prepared = (
        pad_w(w0, in_p, h0_p), pad_b(b0, h0_p),
        pad_w(w1, h0_p, h1_p), pad_b(b1, h1_p),
        pad_w(w2, h1_p, out_p), pad_b(b2, out_p),
    )
    return prepared, out_size


def _pick_tile_and_vmem(B, in_p, h0_p, h1_p, out_p, out_itemsize,
                        weights_bytes, tm_max):
    budget = (48 * _MIB) if _is_v7x() else (100 * _MIB)

    def vmem_estimate(tm):
        x_tile = 2 * tm * in_p * 2                   # double-buffered bf16 x
        o_tile = 2 * tm * out_p * out_itemsize       # double-buffered output
        inter = tm * (h0_p + h1_p) * 4 + tm * max(h0_p, h1_p, out_p) * 4
        return x_tile + o_tile + inter + 2 * weights_bytes

    # tm floor 16 (bf16 native (16,128) sublane packing). No grid split unless
    # the batch exceeds tm_max: the grid is a serial loop on 1-TC v5e/v6e, and
    # tm_max (default 512) keeps any v7x split 256-aligned for the MXU.
    tm = max(16, min(tm_max, _round_up(B, 16)))
    while tm > 16 and vmem_estimate(tm) > budget:
        tm = max(16, _round_up(tm // 2, 16))
    vmem_limit = int(min(budget, max(32 * _MIB, vmem_estimate(tm) + 8 * _MIB)))
    return tm, vmem_limit


@functools.partial(jax.jit, static_argnames=("out_size", "tm_max", "out_dtype"))
def nn_forward(x, prepared, *, out_size, tm_max=512, out_dtype=jnp.float32):
    """Fused MLP forward: Linear -> tanh -> Linear -> tanh -> Linear.

    x: [B, inSize] float32.  `prepared` comes from prepare_params(params).
    """
    w0p, b0p, w1p, b1p, w2p, b2p = prepared
    B, in_size = x.shape
    in_p, h0_p = w0p.shape
    h1_p = w1p.shape[1]
    out_p = w2p.shape[1]

    out_itemsize = jnp.dtype(out_dtype).itemsize
    weights_bytes = int(sum(a.size * a.dtype.itemsize for a in prepared))
    tm, vmem_limit = _pick_tile_and_vmem(B, in_p, h0_p, h1_p, out_p,
                                         out_itemsize, weights_bytes, tm_max)
    B_pad = _round_up(B, tm)
    grid = B_pad // tm

    # Per-call activation padding / cast only (weights already prepared).
    xp = jnp.pad(x, ((0, B_pad - B), (0, in_p - in_size))).astype(jnp.bfloat16)

    cost = pl.CostEstimate(
        flops=2 * B_pad * (in_p * h0_p + h0_p * h1_p + h1_p * out_p),
        transcendentals=B_pad * (h0_p + h1_p),
        bytes_accessed=int(xp.size * 2 + weights_bytes
                           + B_pad * out_p * out_itemsize),
    )

    # Grid-invariant weights/biases: single VMEM buffer when the grid actually
    # loops (double-buffering a constant operand only burns VMEM, esp. v7x).
    single_buffer = grid > 1

    def full_spec(arr):
        nd = arr.ndim
        idx = lambda i, _nd=nd: (0,) * _nd
        if single_buffer:
            return pl.BlockSpec(arr.shape, idx, pipeline_mode=pl.Buffered(1))
        return pl.BlockSpec(arr.shape, idx)

    out = pl.pallas_call(
        _make_mlp_kernel(_use_bf16_epilogue()),
        out_shape=jax.ShapeDtypeStruct((B_pad, out_p), out_dtype),
        grid_spec=pltpu.PrefetchScalarGridSpec(
            num_scalar_prefetch=0,
            grid=(grid,),
            in_specs=[
                pl.BlockSpec((tm, in_p), lambda i: (i, 0)),
                full_spec(w0p), full_spec(b0p),
                full_spec(w1p), full_spec(b1p),
                full_spec(w2p), full_spec(b2p),
            ],
            out_specs=pl.BlockSpec((tm, out_p), lambda i: (i, 0)),
        ),
        compiler_params=pltpu.CompilerParams(
            dimension_semantics=("parallel",),
            vmem_limit_bytes=vmem_limit,
        ),
        cost_estimate=cost,
    )(xp, w0p, b0p, w1p, b1p, w2p, b2p)

    # Elide the post-kernel slice when there is no padding (a slice is a full
    # output-sized HBM round trip).
    if B_pad == B and out_p == out_size:
        return out
    return out[:B, :out_size]


def init_params(key, in_size, layers, out_size):
    """Deterministic init mirroring NN.__init__ shapes (Linear(in, out))."""
    sizes = [in_size] + list(layers) + [out_size]
    params = []
    for fan_in, fan_out in zip(sizes[:-1], sizes[1:]):
        key, kw, kb = jax.random.split(key, 3)
        bound = 1.0 / jnp.sqrt(fan_in)
        # stored as [in, out] (transpose of torch's [out, in])
        w = jax.random.uniform(kw, (fan_in, fan_out), jnp.float32, -bound, bound)
        b = jax.random.uniform(kb, (1, fan_out), jnp.float32, -bound, bound)
        params.append((w, b))
    return tuple(params)


def nn_forward_ref(x, params):
    (w0, b0), (w1, b1), (w2, b2) = params
    h = jnp.tanh(x @ w0 + b0)
    h = jnp.tanh(h @ w1 + b1)
    return h @ w2 + b2


if __name__ == "__main__":
    key = jax.random.PRNGKey(0)
    in_size, layers, out_size = 32, [64, 32], 16
    batch = 16

    kx, kp = jax.random.split(key)
    x = jax.random.normal(kx, (batch, in_size), jnp.float32)
    params = init_params(kp, in_size, layers, out_size)

    # One-time weight preparation (pad to lane-dense 128 multiples, cast bf16).
    prepared, out_sz = prepare_params(params)

    out = nn_forward(x, prepared, out_size=out_sz)
    out = jax.block_until_ready(out)

    ref = nn_forward_ref(x, params)
    assert out.shape == (batch, out_size)
    # bf16 matmul operands (f32 accumulation) -> loosen tolerance vs pure f32.
    assert jnp.allclose(out, ref, atol=5e-2, rtol=5e-2)

    print("KERNEL_OK")
</pallas_src>

<mosaic_0001>
module attributes {stable_mosaic.version = 11 : i64} {
  func.func @kernel(%arg0: i32, %arg1: memref<16x128xbf16, #tpu.memory_space<vmem>>, %arg2: memref<128x128xbf16, #tpu.memory_space<vmem>>, %arg3: memref<1x128xf32, #tpu.memory_space<vmem>>, %arg4: memref<128x128xbf16, #tpu.memory_space<vmem>>, %arg5: memref<1x128xf32, #tpu.memory_space<vmem>>, %arg6: memref<128x128xbf16, #tpu.memory_space<vmem>>, %arg7: memref<1x128xf32, #tpu.memory_space<vmem>>, %arg8: memref<16x128xf32, #tpu.memory_space<vmem>>) attributes {dimension_semantics = [#tpu.dimension_semantics<parallel>], iteration_bounds = array<i64: 1>, scalar_prefetch = 0 : i64, scratch_operands = 0 : i64, tpu.core_type = #tpu.core_type<tc>, window_params = [{transform_indices = @transform_0, window_bounds = array<i64: 16, 128>}, {pipeline_mode = #tpu.pipeline_mode<synchronous>, transform_indices = @transform_1, window_bounds = array<i64: 128, 128>}, {pipeline_mode = #tpu.pipeline_mode<synchronous>, transform_indices = @transform_2, window_bounds = array<i64: 1, 128>}, {pipeline_mode = #tpu.pipeline_mode<synchronous>, transform_indices = @transform_3, window_bounds = array<i64: 128, 128>}, {pipeline_mode = #tpu.pipeline_mode<synchronous>, transform_indices = @transform_4, window_bounds = array<i64: 1, 128>}, {pipeline_mode = #tpu.pipeline_mode<synchronous>, transform_indices = @transform_5, window_bounds = array<i64: 128, 128>}, {pipeline_mode = #tpu.pipeline_mode<synchronous>, transform_indices = @transform_6, window_bounds = array<i64: 1, 128>}, {transform_indices = @transform_7, window_bounds = array<i64: 16, 128>}]} {
    %c0 = arith.constant 0 : index
    %c0_0 = arith.constant 0 : index
    %0 = vector.load %arg1[%c0, %c0_0] : memref<16x128xbf16, #tpu.memory_space<vmem>>, vector<16x128xbf16>
    %c0_1 = arith.constant 0 : index
    %c0_2 = arith.constant 0 : index
    %1 = vector.load %arg2[%c0_1, %c0_2] : memref<128x128xbf16, #tpu.memory_space<vmem>>, vector<128x128xbf16>
    %cst = arith.constant dense<0.000000e+00> : vector<16x128xf32>
    %2 = tpu.matmul %0, %1, %cst {dimension_numbers = #tpu.dot_dimension_numbers<[1], [0], [0], [1], [0, 0, 1, 1], [], []>} : vector<16x128xbf16>, vector<128x128xbf16>, vector<16x128xf32> -> vector<16x128xf32>
    %c0_3 = arith.constant 0 : index
    %c0_4 = arith.constant 0 : index
    %3 = vector.load %arg3[%c0_3, %c0_4] : memref<1x128xf32, #tpu.memory_space<vmem>>, vector<1x128xf32>
    %4 = vector.broadcast %3 : vector<1x128xf32> to vector<16x128xf32>
    %5 = arith.addf %2, %4 : vector<16x128xf32>
    %6 = math.tanh %5 : vector<16x128xf32>
    %7 = arith.truncf %6 : vector<16x128xf32> to vector<16x128xbf16>
    %c0_5 = arith.constant 0 : index
    %c0_6 = arith.constant 0 : index
    %8 = vector.load %arg4[%c0_5, %c0_6] : memref<128x128xbf16, #tpu.memory_space<vmem>>, vector<128x128xbf16>
    %cst_7 = arith.constant dense<0.000000e+00> : vector<16x128xf32>
    %9 = tpu.matmul %7, %8, %cst_7 {dimension_numbers = #tpu.dot_dimension_numbers<[1], [0], [0], [1], [0, 0, 1, 1], [], []>} : vector<16x128xbf16>, vector<128x128xbf16>, vector<16x128xf32> -> vector<16x128xf32>
    %c0_8 = arith.constant 0 : index
    %c0_9 = arith.constant 0 : index
    %10 = vector.load %arg5[%c0_8, %c0_9] : memref<1x128xf32, #tpu.memory_space<vmem>>, vector<1x128xf32>
    %11 = vector.broadcast %10 : vector<1x128xf32> to vector<16x128xf32>
    %12 = arith.addf %9, %11 : vector<16x128xf32>
    %13 = math.tanh %12 : vector<16x128xf32>
    %14 = arith.truncf %13 : vector<16x128xf32> to vector<16x128xbf16>
    %c0_10 = arith.constant 0 : index
    %c0_11 = arith.constant 0 : index
    %15 = vector.load %arg6[%c0_10, %c0_11] : memref<128x128xbf16, #tpu.memory_space<vmem>>, vector<128x128xbf16>
    %cst_12 = arith.constant dense<0.000000e+00> : vector<16x128xf32>
    %16 = tpu.matmul %14, %15, %cst_12 {dimension_numbers = #tpu.dot_dimension_numbers<[1], [0], [0], [1], [0, 0, 1, 1], [], []>} : vector<16x128xbf16>, vector<128x128xbf16>, vector<16x128xf32> -> vector<16x128xf32>
    %c0_13 = arith.constant 0 : index
    %c0_14 = arith.constant 0 : index
    %17 = vector.load %arg7[%c0_13, %c0_14] : memref<1x128xf32, #tpu.memory_space<vmem>>, vector<1x128xf32>
    %18 = vector.broadcast %17 : vector<1x128xf32> to vector<16x128xf32>
    %19 = arith.addf %16, %18 : vector<16x128xf32>
    %c0_15 = arith.constant 0 : index
    %c0_16 = arith.constant 0 : index
    %20 = vector.load %arg8[%c0_15, %c0_16] : memref<16x128xf32, #tpu.memory_space<vmem>>, vector<16x128xf32>
    tpu.vector_store %arg8[%c0_15, %c0_16], %19 {strides = array<i32>} : memref<16x128xf32, #tpu.memory_space<vmem>>, vector<16x128xf32>,
    return
  }
  func.func @transform_0(%arg0: i32) -> (i32, i32) {
    %c0_i32 = arith.constant 0 : i32
    %c0_i32_0 = arith.constant 0 : i32
    return %arg0, %c0_i32 : i32, i32
  }
  func.func @transform_1(%arg0: i32) -> (i32, i32) {
    %c0_i32 = arith.constant 0 : i32
    %c0_i32_0 = arith.constant 0 : i32
    %c0_i32_1 = arith.constant 0 : i32
    return %c0_i32, %c0_i32_0 : i32, i32
  }
  func.func @transform_2(%arg0: i32) -> (i32, i32) {
    %c0_i32 = arith.constant 0 : i32
    %c0_i32_0 = arith.constant 0 : i32
    %c0_i32_1 = arith.constant 0 : i32
    return %c0_i32, %c0_i32_0 : i32, i32
  }
  func.func @transform_3(%arg0: i32) -> (i32, i32) {
    %c0_i32 = arith.constant 0 : i32
    %c0_i32_0 = arith.constant 0 : i32
    %c0_i32_1 = arith.constant 0 : i32
    return %c0_i32, %c0_i32_0 : i32, i32
  }
  func.func @transform_4(%arg0: i32) -> (i32, i32) {
    %c0_i32 = arith.constant 0 : i32
    %c0_i32_0 = arith.constant 0 : i32
    %c0_i32_1 = arith.constant 0 : i32
    return %c0_i32, %c0_i32_0 : i32, i32
  }
  func.func @transform_5(%arg0: i32) -> (i32, i32) {
    %c0_i32 = arith.constant 0 : i32
    %c0_i32_0 = arith.constant 0 : i32
    %c0_i32_1 = arith.constant 0 : i32
    return %c0_i32, %c0_i32_0 : i32, i32
  }
  func.func @transform_6(%arg0: i32) -> (i32, i32) {
    %c0_i32 = arith.constant 0 : i32
    %c0_i32_0 = arith.constant 0 : i32
    %c0_i32_1 = arith.constant 0 : i32
    return %c0_i32, %c0_i32_0 : i32, i32
  }
  func.func @transform_7(%arg0: i32) -> (i32, i32) {
    %c0_i32 = arith.constant 0 : i32
    %c0_i32_0 = arith.constant 0 : i32
    return %arg0, %c0_i32 : i32, i32
  }
}

</mosaic_0001>

<llo_original>
// kernel: nn_forward.1
$region0: #{nn_forward.1}
  #allocation0 [shape = 'u32[]', space=smem, size = 0x4, offset = 0x4, fixed_abs, tag = 'smem constant byte address 0x4 - core index']
  #allocation1 [shape = 'u32[144,128]{1,0:T(1,128)}', space=vmem, size = 0x12000, scoped, tag = 'internal scratch']
  %s0 = inlined_call_operand.vmem [shape: bf16[16,128], index: 0, kind: input, shape index: {}]
  %s1 = inlined_call_operand.hbm [shape: bf16[128,128], index: 1, kind: input, shape index: {}]
  %s2 = inlined_call_operand.vmem [shape: f32[1,128], index: 2, kind: input, shape index: {}]
  %s3 = inlined_call_operand.hbm [shape: bf16[128,128], index: 3, kind: input, shape index: {}]
  %s4 = inlined_call_operand.vmem [shape: f32[1,128], index: 4, kind: input, shape index: {}]
  %s5 = inlined_call_operand.hbm [shape: bf16[128,128], index: 5, kind: input, shape index: {}]
  %s6 = inlined_call_operand.vmem [shape: f32[1,128], index: 6, kind: input, shape index: {}]
  %s7 = inlined_call_operand.hbm [shape: f32[16,128], index: 7, kind: output, shape index: {}]
  %s8 = sld [smem:[#allocation0]]
  $region50: #{nn_forward.1} parent=0
    _
  %s10 = ssub.s32 1, %s8
  %s11 = scalar_select 0, %s10, %s8
  $region1: #{nn_forward.1} parent=0
    #allocation2 [shape = 'u8[32768]{0}', space=vmem, size = 0x8000, scoped, tag = 'input window, operand 1, single buffered']
    #allocation3 [shape = 's32[1]{0}', space=sflag, size = 0x4, scoped, tag = 'scoped memory for nn_forward.1']
    #allocation4 [shape = 's32[1]{0}', space=sflag, size = 0x4, scoped, tag = 'scoped memory for nn_forward.1']
    #allocation5 [shape = 'u8[32768]{0}', space=vmem, size = 0x8000, scoped, tag = 'input window, operand 3, single buffered']
    #allocation6 [shape = 's32[1]{0}', space=sflag, size = 0x4, scoped, tag = 'scoped memory for nn_forward.1']
    #allocation7 [shape = 'u8[32768]{0}', space=vmem, size = 0x8000, scoped, tag = 'input window, operand 5, single buffered']
    #allocation8 [shape = 'u8[8192]{0}', space=vmem, size = 0x2000, scoped, tag = 'output window, operand 0, single buffered']
    %12 = vsyncpa [#allocation3], 0
    %13 = vsyncpa [#allocation6], 0
    %14 = vsyncpa [#allocation4], 0
    // Predicated region
    $region2: #{nn_forward.1} parent=1 // pred_check
      _
    $region3: #{nn_forward.1} parent=1 // pred_check_branch
      %16 = sbr.rel (0) target = $region5
    $region4: #{nn_forward.1} parent=1 // pred_region
      _
    $region5: #{nn_forward.1} parent=1 // pred_fallthru
      _
    // Predicated region
    $region6: #{nn_forward.1} parent=1 // pred_check
      _
    $region7: #{nn_forward.1} parent=1 // pred_check_branch
      %18 = sbr.rel (0) target = $region9
    $region8: #{nn_forward.1} parent=1 // pred_region
      %s20 = ssub.s32 1024, 1024
      %21 = vsyncadd [#allocation3], %s20
      %s22 = sshll.u32 [#allocation2], 4
      %s23 = int_to_ptr.vmem [resolvable:$true] %s22
      %28 = dma.hbm_to_vmem [thread:$0]  %s1, 1024, %s23, [#allocation3], 64, 64, 4
    $region9: #{nn_forward.1} parent=1 // pred_fallthru
      _
    // Predicated region
    $region10: #{nn_forward.1} parent=1 // pred_check
      _
    $region11: #{nn_forward.1} parent=1 // pred_check_branch
      %30 = sbr.rel (0) target = $region13
    $region12: #{nn_forward.1} parent=1 // pred_region
      _
    $region13: #{nn_forward.1} parent=1 // pred_fallthru
      _
    // Predicated region
    $region14: #{nn_forward.1} parent=1 // pred_check
      _
    $region15: #{nn_forward.1} parent=1 // pred_check_branch
      %32 = sbr.rel (0) target = $region17
    $region16: #{nn_forward.1} parent=1 // pred_region
      %s34 = ssub.s32 1024, 1024
      %35 = vsyncadd [#allocation6], %s34
      %s36 = sshll.u32 [#allocation5], 4
      %s37 = int_to_ptr.vmem [resolvable:$true] %s36
      %42 = dma.hbm_to_vmem [thread:$0]  %s3, 1024, %s37, [#allocation6], 64, 64, 4
    $region17: #{nn_forward.1} parent=1 // pred_fallthru
      _
    // Predicated region
    $region18: #{nn_forward.1} parent=1 // pred_check
      _
    $region19: #{nn_forward.1} parent=1 // pred_check_branch
      %44 = sbr.rel (0) target = $region21
    $region20: #{nn_forward.1} parent=1 // pred_region
      _
    $region21: #{nn_forward.1} parent=1 // pred_fallthru
      _
    // Predicated region
    $region22: #{nn_forward.1} parent=1 // pred_check
      _
    $region23: #{nn_forward.1} parent=1 // pred_check_branch
      %46 = sbr.rel (0) target = $region25
    $region24: #{nn_forward.1} parent=1 // pred_region
      %s48 = ssub.s32 1024, 1024
      %49 = vsyncadd [#allocation6], %s48
      %s50 = sshll.u32 [#allocation7], 4
      %s51 = int_to_ptr.vmem [resolvable:$true] %s50
      %56 = dma.hbm_to_vmem [thread:$0]  %s5, 1024, %s51, [#allocation6], 64, 64, 4
    $region25: #{nn_forward.1} parent=1 // pred_fallthru
      _
    // Predicated region
    $region26: #{nn_forward.1} parent=1 // pred_check
      _
    $region27: #{nn_forward.1} parent=1 // pred_check_branch
      %58 = sbr.rel (0) target = $region29
    $region28: #{nn_forward.1} parent=1 // pred_region
      _
    $region29: #{nn_forward.1} parent=1 // pred_fallthru
      _
    // Predicated region
    $region30: #{nn_forward.1} parent=1 // pred_check
      _
    $region31: #{nn_forward.1} parent=1 // pred_check_branch
      %60 = sbr.rel (0) target = $region33
    $region32: #{nn_forward.1} parent=1 // pred_region
      %61 = dma.done [#allocation3], 1024
    $region33: #{nn_forward.1} parent=1 // pred_fallthru
      _
    // Predicated region
    $region34: #{nn_forward.1} parent=1 // pred_check
      _
    $region35: #{nn_forward.1} parent=1 // pred_check_branch
      %63 = sbr.rel (0) target = $region37
    $region36: #{nn_forward.1} parent=1 // pred_region
      %64 = dma.done [#allocation6], 1024
    $region37: #{nn_forward.1} parent=1 // pred_fallthru
      _
    // Predicated region
    $region38: #{nn_forward.1} parent=1 // pred_check
      _
    $region39: #{nn_forward.1} parent=1 // pred_check_branch
      %66 = sbr.rel (0) target = $region41
    $region40: #{nn_forward.1} parent=1 // pred_region
      %67 = dma.done [#allocation6], 1024
    $region41: #{nn_forward.1} parent=1 // pred_fallthru
      _
    %v69 = vld [vmem:[%s0] sm:$0xf]
    %v70 = vld [vmem:[%s0 + $0x4] sm:$0xf]
    %v71 = vld [vmem:[#allocation2] sm:$0xf]
    %v72 = vld [vmem:[#allocation2 + $0x4] sm:$0xf]
    %v73 = vld [vmem:[#allocation2 + $0x8] sm:$0xf]
    %v74 = vld [vmem:[#allocation2 + $0xc] sm:$0xf]
    %v75 = vld [vmem:[#allocation2 + $0x10] sm:$0xf]
    %v76 = vld [vmem:[#allocation2 + $0x14] sm:$0xf]
    %v77 = vld [vmem:[#allocation2 + $0x18] sm:$0xf]
    %v78 = vld [vmem:[#allocation2 + $0x1c] sm:$0xf]
    %v79 = vld [vmem:[#allocation2 + $0x20] sm:$0xf]
    %v80 = vld [vmem:[#allocation2 + $0x24] sm:$0xf]
    %v81 = vld [vmem:[#allocation2 + $0x28] sm:$0xf]
    %v82 = vld [vmem:[#allocation2 + $0x2c] sm:$0xf]
    %v83 = vld [vmem:[#allocation2 + $0x30] sm:$0xf]
    %v84 = vld [vmem:[#allocation2 + $0x34] sm:$0xf]
    %v85 = vld [vmem:[#allocation2 + $0x38] sm:$0xf]
    %v86 = vld [vmem:[#allocation2 + $0x3c] sm:$0xf]
    %v87 = vld [vmem:[%s2] sm:$0x1]
    %v89 = vlaneseq
    %v90 = vshrl.u32 %v89, 7
    %v91 = vsub.s32 0, %v90
    %v92 = vrot.slane %v87, %v91
    %v96 = vunpack.c.l.b16 %v69
    %v97 = vunpack.c.l.b16 %v70
    %v98 = vpack.c.b16 %v97, %v96
    %v116 = vunpack.c.l.b16 %v71
    %v117 = vunpack.c.l.b16 %v72
    %v118 = vunpack.c.l.b16 %v73
    %v119 = vunpack.c.l.b16 %v74
    %v120 = vunpack.c.l.b16 %v75
    %v121 = vunpack.c.l.b16 %v76
    %v122 = vunpack.c.l.b16 %v77
    %v123 = vunpack.c.l.b16 %v78
    %v124 = vunpack.c.l.b16 %v79
    %v125 = vunpack.c.l.b16 %v80
    %v126 = vunpack.c.l.b16 %v81
    %v127 = vunpack.c.l.b16 %v82
    %v128 = vunpack.c.l.b16 %v83
    %v129 = vunpack.c.l.b16 %v84
    %v130 = vunpack.c.l.b16 %v85
    %v131 = vunpack.c.l.b16 %v86
    %v132 = vpack.c.b16 %v117, %v116
    %v133 = vpack.c.b16 %v119, %v118
    %v134 = vpack.c.b16 %v121, %v120
    %v135 = vpack.c.b16 %v123, %v122
    %v136 = vpack.c.b16 %v125, %v124
    %v137 = vpack.c.b16 %v127, %v126
    %v138 = vpack.c.b16 %v129, %v128
    %v139 = vpack.c.b16 %v131, %v130
    %148 = vmatprep.subr.bf16.mxu0 0
    %149 = vmatpush1.bf16.msra.mxu0 %v132
    %150 = vmatprep.subr.bf16.mxu0 0
    %151 = vmatpush1.bf16.msra.mxu0 %v133
    %152 = vmatprep.subr.bf16.mxu0 0
    %153 = vmatpush1.bf16.msra.mxu0 %v134
    %154 = vmatprep.subr.bf16.mxu0 0
    %155 = vmatpush1.bf16.msra.mxu0 %v135
    %156 = vmatprep.subr.bf16.mxu0 0
    %157 = vmatpush1.bf16.msra.mxu0 %v136
    %158 = vmatprep.subr.bf16.mxu0 0
    %159 = vmatpush1.bf16.msra.mxu0 %v137
    %160 = vmatprep.subr.bf16.mxu0 0
    %161 = vmatpush1.bf16.msra.mxu0 %v138
    %162 = vmatprep.subr.bf16.mxu0 0
    %163 = vmatpush1.bf16.msra.mxu0 %v139
    %164 = vmatprep.subr.bf16.mxu0 0
    %165 = vmatpush1.bf16.msra.mxu0 0
    %166 = vmatprep.subr.bf16.mxu0 0
    %167 = vmatpush1.bf16.msra.mxu0 0
    %168 = vmatprep.subr.bf16.mxu0 0
    %169 = vmatpush1.bf16.msra.mxu0 0
    %170 = vmatprep.subr.bf16.mxu0 0
    %171 = vmatpush1.bf16.msra.mxu0 0
    %172 = vmatprep.subr.bf16.mxu0 0
    %173 = vmatpush1.bf16.msra.mxu0 0
    %174 = vmatprep.subr.bf16.mxu0 0
    %175 = vmatpush1.bf16.msra.mxu0 0
    %176 = vmatprep.subr.bf16.mxu0 0
    %177 = vmatpush1.bf16.msra.mxu0 0
    %178 = vmatprep.subr.bf16.mxu0 0
    %179 = vmatpush1.bf16.msra.mxu0 0
    %180 = vmatprep.mubr.bf16.mxu0 0
    %181 = vmatmul.mubr.bf16.gmra.mrb[0].mxu0 %v98
    %v182 = vpop.f32.mrb[0].mxu0
    %v183 = vadd.f32 %v92, %v182
    %v184 = vpop.f32.mrb[0].mxu0
    %v185 = vpop.f32.mrb[0].mxu0
    %v186 = vadd.f32 %v92, %v185
    %v187 = vpop.f32.mrb[0].mxu0
    %188 = vdwg.mxu0
    %v189 = vtanh.pop %v183
    %v190 = vtanh.pop %v186
    %v191 = vpack.c.bf16 %v190, %v189
    %v192 = vld [vmem:[#allocation5] sm:$0xf]
    %v193 = vld [vmem:[#allocation5 + $0x4] sm:$0xf]
    %v194 = vld [vmem:[#allocation5 + $0x8] sm:$0xf]
    %v195 = vld [vmem:[#allocation5 + $0xc] sm:$0xf]
    %v196 = vld [vmem:[#allocation5 + $0x10] sm:$0xf]
    %v197 = vld [vmem:[#allocation5 + $0x14] sm:$0xf]
    %v198 = vld [vmem:[#allocation5 + $0x18] sm:$0xf]
    %v199 = vld [vmem:[#allocation5 + $0x1c] sm:$0xf]
    %v200 = vld [vmem:[#allocation5 + $0x20] sm:$0xf]
    %v201 = vld [vmem:[#allocation5 + $0x24] sm:$0xf]
    %v202 = vld [vmem:[#allocation5 + $0x28] sm:$0xf]
    %v203 = vld [vmem:[#allocation5 + $0x2c] sm:$0xf]
    %v204 = vld [vmem:[#allocation5 + $0x30] sm:$0xf]
    %v205 = vld [vmem:[#allocation5 + $0x34] sm:$0xf]
    %v206 = vld [vmem:[#allocation5 + $0x38] sm:$0xf]
    %v207 = vld [vmem:[#allocation5 + $0x3c] sm:$0xf]
    %v208 = vld [vmem:[%s4] sm:$0x1]
    %v210 = vlaneseq
    %v211 = vshrl.u32 %v210, 7
    %v212 = vsub.s32 0, %v211
    %v213 = vrot.slane %v208, %v212
    %v231 = vunpack.c.l.b16 %v192
    %v232 = vunpack.c.l.b16 %v193
    %v233 = vunpack.c.l.b16 %v194
    %v234 = vunpack.c.l.b16 %v195
    %v235 = vunpack.c.l.b16 %v196
    %v236 = vunpack.c.l.b16 %v197
    %v237 = vunpack.c.l.b16 %v198
    %v238 = vunpack.c.l.b16 %v199
    %v239 = vunpack.c.l.b16 %v200
    %v240 = vunpack.c.l.b16 %v201
    %v241 = vunpack.c.l.b16 %v202
    %v242 = vunpack.c.l.b16 %v203
    %v243 = vunpack.c.l.b16 %v204
    %v244 = vunpack.c.l.b16 %v205
    %v245 = vunpack.c.l.b16 %v206
    %v246 = vunpack.c.l.b16 %v207
    %v247 = vpack.c.b16 %v232, %v231
    %v248 = vpack.c.b16 %v234, %v233
    %v249 = vpack.c.b16 %v236, %v235
    %v250 = vpack.c.b16 %v238, %v237
    %v251 = vpack.c.b16 %v240, %v239
    %v252 = vpack.c.b16 %v242, %v241
    %v253 = vpack.c.b16 %v244, %v243
    %v254 = vpack.c.b16 %v246, %v245
    %263 = vmatprep.subr.bf16.mxu0 0
    %264 = vmatpush1.bf16.msra.mxu0 %v247
    %265 = vmatprep.subr.bf16.mxu0 0
    %266 = vmatpush1.bf16.msra.mxu0 %v248
    %267 = vmatprep.subr.bf16.mxu0 0
    %268 = vmatpush1.bf16.msra.mxu0 %v249
    %269 = vmatprep.subr.bf16.mxu0 0
    %270 = vmatpush1.bf16.msra.mxu0 %v250
    %271 = vmatprep.subr.bf16.mxu0 0
    %272 = vmatpush1.bf16.msra.mxu0 %v251
    %273 = vmatprep.subr.bf16.mxu0 0
    %274 = vmatpush1.bf16.msra.mxu0 %v252
    %275 = vmatprep.subr.bf16.mxu0 0
    %276 = vmatpush1.bf16.msra.mxu0 %v253
    %277 = vmatprep.subr.bf16.mxu0 0
    %278 = vmatpush1.bf16.msra.mxu0 %v254
    %279 = vmatprep.subr.bf16.mxu0 0
    %280 = vmatpush1.bf16.msra.mxu0 0
    %281 = vmatprep.subr.bf16.mxu0 0
    %282 = vmatpush1.bf16.msra.mxu0 0
    %283 = vmatprep.subr.bf16.mxu0 0
    %284 = vmatpush1.bf16.msra.mxu0 0
    %285 = vmatprep.subr.bf16.mxu0 0
    %286 = vmatpush1.bf16.msra.mxu0 0
    %287 = vmatprep.subr.bf16.mxu0 0
    %288 = vmatpush1.bf16.msra.mxu0 0
    %289 = vmatprep.subr.bf16.mxu0 0
    %290 = vmatpush1.bf16.msra.mxu0 0
    %291 = vmatprep.subr.bf16.mxu0 0
    %292 = vmatpush1.bf16.msra.mxu0 0
    %293 = vmatprep.subr.bf16.mxu0 0
    %294 = vmatpush1.bf16.msra.mxu0 0
    %295 = vmatprep.mubr.bf16.mxu0 0
    %296 = vmatmul.mubr.bf16.gmra.mrb[0].mxu0 %v191
    %v297 = vpop.f32.mrb[0].mxu0
    %v298 = vadd.f32 %v213, %v297
    %v299 = vpop.f32.mrb[0].mxu0
    %v300 = vpop.f32.mrb[0].mxu0
    %v301 = vadd.f32 %v213, %v300
    %v302 = vpop.f32.mrb[0].mxu0
    %303 = vdwg.mxu0
    %v304 = vtanh.pop %v298
    %v305 = vtanh.pop %v301
    %v306 = vpack.c.bf16 %v305, %v304
    %v307 = vld [vmem:[#allocation7] sm:$0xf]
    %v308 = vld [vmem:[#allocation7 + $0x4] sm:$0xf]
    %v309 = vld [vmem:[#allocation7 + $0x8] sm:$0xf]
    %v310 = vld [vmem:[#allocation7 + $0xc] sm:$0xf]
    %v311 = vld [vmem:[#allocation7 + $0x10] sm:$0xf]
    %v312 = vld [vmem:[#allocation7 + $0x14] sm:$0xf]
    %v313 = vld [vmem:[#allocation7 + $0x18] sm:$0xf]
    %v314 = vld [vmem:[#allocation7 + $0x1c] sm:$0xf]
    %v315 = vld [vmem:[#allocation7 + $0x20] sm:$0xf]
    %v316 = vld [vmem:[#allocation7 + $0x24] sm:$0xf]
    %v317 = vld [vmem:[#allocation7 + $0x28] sm:$0xf]
    %v318 = vld [vmem:[#allocation7 + $0x2c] sm:$0xf]
    %v319 = vld [vmem:[#allocation7 + $0x30] sm:$0xf]
    %v320 = vld [vmem:[#allocation7 + $0x34] sm:$0xf]
    %v321 = vld [vmem:[#allocation7 + $0x38] sm:$0xf]
    %v322 = vld [vmem:[#allocation7 + $0x3c] sm:$0xf]
    %v323 = vld [vmem:[%s6] sm:$0x1]
    %v325 = vlaneseq
    %v326 = vshrl.u32 %v325, 7
    %v327 = vsub.s32 0, %v326
    %v328 = vrot.slane %v323, %v327
    %v346 = vunpack.c.l.b16 %v307
    %v347 = vunpack.c.l.b16 %v308
    %v348 = vunpack.c.l.b16 %v309
    %v349 = vunpack.c.l.b16 %v310
    %v350 = vunpack.c.l.b16 %v311
    %v351 = vunpack.c.l.b16 %v312
    %v352 = vunpack.c.l.b16 %v313
    %v353 = vunpack.c.l.b16 %v314
    %v354 = vunpack.c.l.b16 %v315
    %v355 = vunpack.c.l.b16 %v316
    %v356 = vunpack.c.l.b16 %v317
    %v357 = vunpack.c.l.b16 %v318
    %v358 = vunpack.c.l.b16 %v319
    %v359 = vunpack.c.l.b16 %v320
    %v360 = vunpack.c.l.b16 %v321
    %v361 = vunpack.c.l.b16 %v322
    %v362 = vpack.c.b16 %v347, %v346
    %v363 = vpack.c.b16 %v349, %v348
    %v364 = vpack.c.b16 %v351, %v350
    %v365 = vpack.c.b16 %v353, %v352
    %v366 = vpack.c.b16 %v355, %v354
    %v367 = vpack.c.b16 %v357, %v356
    %v368 = vpack.c.b16 %v359, %v358
    %v369 = vpack.c.b16 %v361, %v360
    %378 = vmatprep.subr.bf16.mxu0 0
    %379 = vmatpush1.bf16.msra.mxu0 %v362
    %380 = vmatprep.subr.bf16.mxu0 0
    %381 = vmatpush1.bf16.msra.mxu0 %v363
    %382 = vmatprep.subr.bf16.mxu0 0
    %383 = vmatpush1.bf16.msra.mxu0 %v364
    %384 = vmatprep.subr.bf16.mxu0 0
    %385 = vmatpush1.bf16.msra.mxu0 %v365
    %386 = vmatprep.subr.bf16.mxu0 0
    %387 = vmatpush1.bf16.msra.mxu0 %v366
    %388 = vmatprep.subr.bf16.mxu0 0
    %389 = vmatpush1.bf16.msra.mxu0 %v367
    %390 = vmatprep.subr.bf16.mxu0 0
    %391 = vmatpush1.bf16.msra.mxu0 %v368
    %392 = vmatprep.subr.bf16.mxu0 0
    %393 = vmatpush1.bf16.msra.mxu0 %v369
    %394 = vmatprep.subr.bf16.mxu0 0
    %395 = vmatpush1.bf16.msra.mxu0 0
    %396 = vmatprep.subr.bf16.mxu0 0
    %397 = vmatpush1.bf16.msra.mxu0 0
    %398 = vmatprep.subr.bf16.mxu0 0
    %399 = vmatpush1.bf16.msra.mxu0 0
    %400 = vmatprep.subr.bf16.mxu0 0
    %401 = vmatpush1.bf16.msra.mxu0 0
    %402 = vmatprep.subr.bf16.mxu0 0
    %403 = vmatpush1.bf16.msra.mxu0 0
    %404 = vmatprep.subr.bf16.mxu0 0
    %405 = vmatpush1.bf16.msra.mxu0 0
    %406 = vmatprep.subr.bf16.mxu0 0
    %407 = vmatpush1.bf16.msra.mxu0 0
    %408 = vmatprep.subr.bf16.mxu0 0
    %409 = vmatpush1.bf16.msra.mxu0 0
    %410 = vmatprep.mubr.bf16.mxu0 0
    %411 = vmatmul.mubr.bf16.gmra.mrb[0].mxu0 %v306
    %v412 = vpop.f32.mrb[0].mxu0
    %v413 = vadd.f32 %v328, %v412
    %v414 = vpop.f32.mrb[0].mxu0
    %v415 = vpop.f32.mrb[0].mxu0
    %v416 = vadd.f32 %v328, %v415
    %v417 = vpop.f32.mrb[0].mxu0
    %418 = vdwg.mxu0
    %419 = vst [vmem:[#allocation8] sm:$0xff] %v413
    %420 = vst [vmem:[#allocation8 + $0x8] sm:$0xff] %v416
    // Predicated region
    $region42: #{nn_forward.1} parent=1 // pred_check
      _
    $region43: #{nn_forward.1} parent=1 // pred_check_branch
      %422 = sbr.rel (0) target = $region45
    $region44: #{nn_forward.1} parent=1 // pred_region
      %s424 = ssub.s32 256, 256
      %425 = vsyncadd [#allocation4], %s424
      %s426 = sshll.u32 [#allocation8], 4
      %s427 = int_to_ptr.vmem [resolvable:$true] %s426
      %432 = dma.vmem_to_hbm [thread:$0]  %s427, 256, %s7, [#allocation4], 128, 128, 8
    $region45: #{nn_forward.1} parent=1 // pred_fallthru
      _
    // Predicated region
    $region46: #{nn_forward.1} parent=1 // pred_check
      _
    $region47: #{nn_forward.1} parent=1 // pred_check_branch
      %434 = sbr.rel (0) target = $region49
    $region48: #{nn_forward.1} parent=1 // pred_region
      %435 = dma.done [#allocation4], 256
    $region49: #{nn_forward.1} parent=1 // pred_fallthru
      _
    %436 = vsyncpa [#allocation3], 1
    %437 = vsyncpa [#allocation6], 1
    %438 = vsyncpa [#allocation4], 1

</llo_original>
